<compile_context>
chip_gen: v5e
topology: v5e:2x2
jax: 0.10.0
libtpu: 0.0.40
codegen_flags: <defaults>
</compile_context>

<pallas_src>
import jax
import jax.numpy as jnp
from jax.experimental import pallas as pl
from jax.experimental.pallas import tpu as pltpu

EPS = 1e-5  # PyTorch nn.LayerNorm default


def sublayer_connection_kernel(x0_ref, x1_ref, w_ref, b_ref, g_ref, beta_ref, o_ref):
    # x0_ref/x1_ref: [TS, H]   w_ref: [H, H]   b/g/beta: [1, H] f32   o_ref: [TS, H]
    x1 = x1_ref[...].astype(w_ref.dtype)                  # match MXU operand dtype

    # sublayer(x) = Linear(x[1])  ->  MXU matmul, f32 accumulation
    s = jnp.dot(x1, w_ref[...], preferred_element_type=jnp.float32) + b_ref[...]

    # dropout (inference mode => identity)
    # TODO(synk): training-mode dropout would use pltpu.prng_seed/prng_random_bits.
    r = x0_ref[...].astype(jnp.float32) + s               # residual add  [TS, H]

    # LayerNorm over the last (lane) dim, biased variance as in torch.
    mean = jnp.mean(r, axis=-1, keepdims=True)
    r = r - mean                                          # reuse r as the centered value
    var = jnp.mean(r * r, axis=-1, keepdims=True)
    inv = jax.lax.rsqrt(var + EPS)                        # EUP rsqrt (~free slot)
    o_ref[...] = ((r * inv) * g_ref[...] + beta_ref[...]).astype(o_ref.dtype)


def sublayer_connection(x, w, b, gamma, beta, *, out_dtype=None, max_ts=512):
    """x: [2, S, H];  w: [H, H] (pre-cast at init — e.g. bf16 — for best perf);
    b/gamma/beta: [H].  Returns [S, H] in out_dtype (default: x.dtype).
    Best layout when H is a multiple of 128 (lane-dense stores / full MXU)."""
    two, S, H = x.shape
    assert two == 2
    out_dtype = x.dtype if out_dtype is None else out_dtype

    x_isz = jnp.dtype(x.dtype).itemsize
    w_isz = jnp.dtype(w.dtype).itemsize
    out_isz = jnp.dtype(out_dtype).itemsize

    # ---- generation-aware VMEM budget / tile selection ------------------------
    try:
        vmem_cap = int(pltpu.get_tpu_info().vmem_capacity_bytes)  # 64 MiB v7x, 128 MiB v5e/v6e
    except Exception:
        vmem_cap = 64 << 20                                        # conservative fallback
    budget = int(vmem_cap * 0.85)                                  # ~15% headroom

    # Resident params are single-buffered (pl.Buffered(1)).
    param_bytes = H * H * w_isz + 3 * H * 4
    # Per-row VMEM: x0 + x1 double-buffered, output double-buffered, plus roughly
    # 3 live [ts, H] f32 temporaries inside the body (matmul result / residual /
    # scaled value) — review item: count the temporaries.
    per_row = H * (2 * 2 * x_isz + 2 * out_isz + 3 * 4)

    avail = max(budget - param_bytes, per_row * 8)
    ts = min(S, max_ts, avail // per_row)
    if ts < S:
        ts = max(8, (ts // 8) * 8)          # (8, 128) tiling rule on partial blocks
    grid = (pl.cdiv(S, ts),)

    used = ts * per_row + param_bytes
    vmem_limit = int(min(budget, max(int(used * 1.3), 32 << 20)))  # no double-counting

    cost = pl.CostEstimate(
        flops=2 * S * H * H + 10 * S * H,
        transcendentals=S,                                          # one rsqrt per row
        bytes_accessed=2 * S * H * x_isz + H * H * w_isz + S * H * out_isz + 3 * H * 4,
    )

    b2 = b.reshape(1, H).astype(jnp.float32)
    g2 = gamma.reshape(1, H).astype(jnp.float32)
    be2 = beta.reshape(1, H).astype(jnp.float32)

    def resident(shape):
        # Constant index_map -> single buffer is enough; halves resident VMEM.
        return pl.BlockSpec(shape, lambda i: (0,) * len(shape),
                            pipeline_mode=pl.Buffered(1))

    # TODO(synk): for short S with very large H, hide the one-time W DMA behind a
    # preceding pallas_call returning a (SEMAPHORE, VMEM) future (P10), or split
    # W's output dim over a second grid axis / the two v7x TensorCores.
    # TODO(synk): fp8 weights (v7x) or int8 (v5e/v6e) with per-channel scales would
    # halve W traffic again; keep f32 accumulation.
    return pl.pallas_call(
        sublayer_connection_kernel,
        out_shape=jax.ShapeDtypeStruct((S, H), out_dtype),
        grid=grid,
        in_specs=[
            pl.BlockSpec((pl.Squeezed(), ts, H), lambda i: (0, i, 0)),  # x[0] residual
            pl.BlockSpec((pl.Squeezed(), ts, H), lambda i: (1, i, 0)),  # x[1] matmul input
            resident((H, H)),                                            # W  (single-buffered)
            resident((1, H)),                                            # b
            resident((1, H)),                                            # gamma
            resident((1, H)),                                            # beta
        ],
        out_specs=pl.BlockSpec((ts, H), lambda i: (i, 0)),
        compiler_params=pltpu.CompilerParams(
            dimension_semantics=("parallel",) if grid[0] > 1 else ("arbitrary",),
            vmem_limit_bytes=vmem_limit,
        ),
        cost_estimate=cost,
    )(x, x, w, b2, g2, be2)


def _reference(x, w, b, gamma, beta):
    s = x[1].astype(jnp.float32) @ w.astype(jnp.float32) + b
    r = x[0].astype(jnp.float32) + s
    mean = r.mean(axis=-1, keepdims=True)
    var = ((r - mean) ** 2).mean(axis=-1, keepdims=True)
    return (r - mean) / jnp.sqrt(var + EPS) * gamma + beta


if __name__ == "__main__":
    S, H = 32, 128  # small demo; H a multiple of 128 (lane-dense output, full MXU)
    key = jax.random.PRNGKey(0)
    kx, kw, kb = jax.random.split(key, 3)

    x = jax.random.normal(kx, (2, S, H), dtype=jnp.float32)
    w_f32 = jax.random.normal(kw, (H, H), dtype=jnp.float32) * 0.05
    b = jax.random.normal(kb, (H,), dtype=jnp.float32) * 0.01
    gamma = jnp.ones((H,), dtype=jnp.float32)   # nn.LayerNorm default weight
    beta = jnp.zeros((H,), dtype=jnp.float32)   # nn.LayerNorm default bias

    # "Init-time" weight cache: cast W to bf16 once, never per call (review item).
    # Pass w_f32 instead for exact f32 torch parity at a throughput cost.
    w = w_f32.astype(jnp.bfloat16)

    out = jax.block_until_ready(
        sublayer_connection(x, w, b, gamma, beta, max_ts=16))  # 2-tile grid, exercises pipeline
    ref = _reference(x, w_f32, b, gamma, beta)
    assert out.shape == (S, H)
    # bf16 MXU operands -> relaxed tolerance (LayerNorm absorbs most of the error).
    assert jnp.allclose(out, ref, atol=2e-2, rtol=2e-2)
    print("KERNEL_OK")
</pallas_src>

<mosaic_0001>
module attributes {stable_mosaic.version = 11 : i64} {
  func.func @sublayer_connection_kernel(%arg0: i32, %arg1: memref<1x16x128xf32, #tpu.memory_space<vmem>>, %arg2: memref<1x16x128xf32, #tpu.memory_space<vmem>>, %arg3: memref<128x128xbf16, #tpu.memory_space<vmem>>, %arg4: memref<1x128xf32, #tpu.memory_space<vmem>>, %arg5: memref<1x128xf32, #tpu.memory_space<vmem>>, %arg6: memref<1x128xf32, #tpu.memory_space<vmem>>, %arg7: memref<16x128xf32, #tpu.memory_space<vmem>>) attributes {dimension_semantics = [#tpu.dimension_semantics<parallel>], iteration_bounds = array<i64: 2>, scalar_prefetch = 0 : i64, scratch_operands = 0 : i64, tpu.core_type = #tpu.core_type<tc>, window_params = [{transform_indices = @transform_0, window_bounds = array<i64: 1, 16, 128>}, {transform_indices = @transform_1, window_bounds = array<i64: 1, 16, 128>}, {pipeline_mode = #tpu.pipeline_mode<synchronous>, transform_indices = @transform_2, window_bounds = array<i64: 128, 128>}, {pipeline_mode = #tpu.pipeline_mode<synchronous>, transform_indices = @transform_3, window_bounds = array<i64: 1, 128>}, {pipeline_mode = #tpu.pipeline_mode<synchronous>, transform_indices = @transform_4, window_bounds = array<i64: 1, 128>}, {pipeline_mode = #tpu.pipeline_mode<synchronous>, transform_indices = @transform_5, window_bounds = array<i64: 1, 128>}, {transform_indices = @transform_6, window_bounds = array<i64: 16, 128>}]} {
    %c0 = arith.constant 0 : index
    %c0_0 = arith.constant 0 : index
    %c0_1 = arith.constant 0 : index
    %0 = vector.load %arg2[%c0, %c0_0, %c0_1] : memref<1x16x128xf32, #tpu.memory_space<vmem>>, vector<1x16x128xf32>
    %1 = vector.shape_cast %0 : vector<1x16x128xf32> to vector<16x128xf32>
    %2 = arith.truncf %1 : vector<16x128xf32> to vector<16x128xbf16>
    %c0_2 = arith.constant 0 : index
    %c0_3 = arith.constant 0 : index
    %3 = vector.load %arg3[%c0_2, %c0_3] : memref<128x128xbf16, #tpu.memory_space<vmem>>, vector<128x128xbf16>
    %cst = arith.constant dense<0.000000e+00> : vector<16x128xf32>
    %4 = tpu.matmul %2, %3, %cst {dimension_numbers = #tpu.dot_dimension_numbers<[1], [0], [0], [1], [0, 0, 1, 1], [], []>} : vector<16x128xbf16>, vector<128x128xbf16>, vector<16x128xf32> -> vector<16x128xf32>
    %c0_4 = arith.constant 0 : index
    %c0_5 = arith.constant 0 : index
    %5 = vector.load %arg4[%c0_4, %c0_5] : memref<1x128xf32, #tpu.memory_space<vmem>>, vector<1x128xf32>
    %6 = vector.broadcast %5 : vector<1x128xf32> to vector<16x128xf32>
    %7 = arith.addf %4, %6 : vector<16x128xf32>
    %c0_6 = arith.constant 0 : index
    %c0_7 = arith.constant 0 : index
    %c0_8 = arith.constant 0 : index
    %8 = vector.load %arg1[%c0_6, %c0_7, %c0_8] : memref<1x16x128xf32, #tpu.memory_space<vmem>>, vector<1x16x128xf32>
    %9 = vector.shape_cast %8 : vector<1x16x128xf32> to vector<16x128xf32>
    %10 = arith.addf %9, %7 : vector<16x128xf32>
    %cst_9 = arith.constant dense<0.000000e+00> : vector<16xf32>
    %11 = vector.multi_reduction <add>, %10, %cst_9 [1] : vector<16x128xf32> to vector<16xf32>
    %12 = vector.shape_cast %11 : vector<16xf32> to vector<16x1xf32>
    %cst_10 = arith.constant 1.280000e+02 : f32
    %13 = vector.broadcast %cst_10 : f32 to vector<16x1xf32>
    %14 = arith.divf %12, %13 : vector<16x1xf32>
    %15 = vector.broadcast %14 : vector<16x1xf32> to vector<16x128xf32>
    %16 = arith.subf %10, %15 : vector<16x128xf32>
    %17 = arith.mulf %16, %16 : vector<16x128xf32>
    %cst_11 = arith.constant dense<0.000000e+00> : vector<16xf32>
    %18 = vector.multi_reduction <add>, %17, %cst_11 [1] : vector<16x128xf32> to vector<16xf32>
    %19 = vector.shape_cast %18 : vector<16xf32> to vector<16x1xf32>
    %cst_12 = arith.constant 1.280000e+02 : f32
    %20 = vector.broadcast %cst_12 : f32 to vector<16x1xf32>
    %21 = arith.divf %19, %20 : vector<16x1xf32>
    %cst_13 = arith.constant 9.99999974E-6 : f32
    %22 = vector.broadcast %cst_13 : f32 to vector<16x1xf32>
    %23 = arith.addf %21, %22 : vector<16x1xf32>
    %24 = math.rsqrt %23 : vector<16x1xf32>
    %25 = vector.broadcast %24 : vector<16x1xf32> to vector<16x128xf32>
    %26 = arith.mulf %16, %25 : vector<16x128xf32>
    %c0_14 = arith.constant 0 : index
    %c0_15 = arith.constant 0 : index
    %27 = vector.load %arg5[%c0_14, %c0_15] : memref<1x128xf32, #tpu.memory_space<vmem>>, vector<1x128xf32>
    %28 = vector.broadcast %27 : vector<1x128xf32> to vector<16x128xf32>
    %29 = arith.mulf %26, %28 : vector<16x128xf32>
    %c0_16 = arith.constant 0 : index
    %c0_17 = arith.constant 0 : index
    %30 = vector.load %arg6[%c0_16, %c0_17] : memref<1x128xf32, #tpu.memory_space<vmem>>, vector<1x128xf32>
    %31 = vector.broadcast %30 : vector<1x128xf32> to vector<16x128xf32>
    %32 = arith.addf %29, %31 : vector<16x128xf32>
    %c0_18 = arith.constant 0 : index
    %c0_19 = arith.constant 0 : index
    %33 = vector.load %arg7[%c0_18, %c0_19] : memref<16x128xf32, #tpu.memory_space<vmem>>, vector<16x128xf32>
    tpu.vector_store %arg7[%c0_18, %c0_19], %32 {strides = array<i32>} : memref<16x128xf32, #tpu.memory_space<vmem>>, vector<16x128xf32>,
    return
  }
  func.func @transform_0(%arg0: i32) -> (i32, i32, i32) {
    %c0_i32 = arith.constant 0 : i32
    %c0_i32_0 = arith.constant 0 : i32
    %c0_i32_1 = arith.constant 0 : i32
    return %c0_i32, %arg0, %c0_i32_0 : i32, i32, i32
  }
  func.func @transform_1(%arg0: i32) -> (i32, i32, i32) {
    %c1_i32 = arith.constant 1 : i32
    %c0_i32 = arith.constant 0 : i32
    %c0_i32_0 = arith.constant 0 : i32
    return %c1_i32, %arg0, %c0_i32 : i32, i32, i32
  }
  func.func @transform_2(%arg0: i32) -> (i32, i32) {
    %c0_i32 = arith.constant 0 : i32
    %c0_i32_0 = arith.constant 0 : i32
    %c0_i32_1 = arith.constant 0 : i32
    return %c0_i32, %c0_i32_0 : i32, i32
  }
  func.func @transform_3(%arg0: i32) -> (i32, i32) {
    %c0_i32 = arith.constant 0 : i32
    %c0_i32_0 = arith.constant 0 : i32
    %c0_i32_1 = arith.constant 0 : i32
    return %c0_i32, %c0_i32_0 : i32, i32
  }
  func.func @transform_4(%arg0: i32) -> (i32, i32) {
    %c0_i32 = arith.constant 0 : i32
    %c0_i32_0 = arith.constant 0 : i32
    %c0_i32_1 = arith.constant 0 : i32
    return %c0_i32, %c0_i32_0 : i32, i32
  }
  func.func @transform_5(%arg0: i32) -> (i32, i32) {
    %c0_i32 = arith.constant 0 : i32
    %c0_i32_0 = arith.constant 0 : i32
    %c0_i32_1 = arith.constant 0 : i32
    return %c0_i32, %c0_i32_0 : i32, i32
  }
  func.func @transform_6(%arg0: i32) -> (i32, i32) {
    %c0_i32 = arith.constant 0 : i32
    %c0_i32_0 = arith.constant 0 : i32
    return %arg0, %c0_i32 : i32, i32
  }
}

</mosaic_0001>

<llo_original>
// kernel: tpu_custom_call.1
$region0: #{tpu_custom_call.1}
  #allocation0 [shape = 'u32[]', space=smem, size = 0x4, offset = 0x4, fixed_abs, tag = 'smem constant byte address 0x4 - core index']
  #allocation1 [shape = 'u32[72,128]{1,0:T(1,128)}', space=vmem, size = 0x9000, scoped, tag = 'internal scratch']
  %s0 = inlined_call_operand.hbm [shape: f32[2,32,128], index: 0, kind: input, shape index: {}]
  %s1 = inlined_call_operand.hbm [shape: f32[2,32,128], index: 1, kind: input, shape index: {}]
  %s2 = inlined_call_operand.hbm [shape: bf16[128,128], index: 2, kind: input, shape index: {}]
  %s3 = inlined_call_operand.vmem [shape: f32[1,128], index: 3, kind: input, shape index: {}]
  %s4 = inlined_call_operand.vmem [shape: f32[1,128], index: 4, kind: input, shape index: {}]
  %s5 = inlined_call_operand.vmem [shape: f32[1,128], index: 5, kind: input, shape index: {}]
  %s6 = inlined_call_operand.hbm [shape: f32[32,128], index: 6, kind: output, shape index: {}]
  %s7 = sld [smem:[#allocation0]]
  $region69: #{tpu_custom_call.1} parent=0
    _
  %s9 = ssub.s32 1, %s7
  %s10 = scalar_select 0, %s9, %s7
  $region1: #{tpu_custom_call.1} parent=0
    #allocation2 [shape = 'u8[16384]{0}', space=vmem, size = 0x4000, scoped, tag = 'input window, operand 0']
    #allocation3 [shape = 's32[2]{0}', space=sflag, size = 0x8, scoped, tag = 'scoped memory for tpu_custom_call.1']
    #allocation4 [shape = 's32[2]{0}', space=sflag, size = 0x8, scoped, tag = 'scoped memory for tpu_custom_call.1']
    #allocation5 [shape = 'u8[16384]{0}', space=vmem, size = 0x4000, scoped, tag = 'input window, operand 1']
    #allocation6 [shape = 's32[2]{0}', space=sflag, size = 0x8, scoped, tag = 'scoped memory for tpu_custom_call.1']
    #allocation7 [shape = 'u8[32768]{0}', space=vmem, size = 0x8000, scoped, tag = 'input window, operand 2, single buffered']
    #allocation8 [shape = 'u8[16384]{0}', space=vmem, size = 0x4000, scoped, tag = 'output window, operand 0']
    %11 = vsyncpa [#allocation3], 0
    %s12 = scalar_lea.sflag [#allocation3], 1
    %13 = vsyncpa %s12, 0
    %14 = vsyncpa [#allocation6], 0
    %s15 = scalar_lea.sflag [#allocation6], 1
    %16 = vsyncpa %s15, 0
    %17 = vsyncpa [#allocation4], 0
    %s18 = scalar_lea.sflag [#allocation4], 1
    %19 = vsyncpa %s18, 0
    loop: start=0, step=1, limit=4
    $region2: #{tpu_custom_call.1} parent=1 // loop_pre_header
      _
    $region3: #{tpu_custom_call.1} parent=1 // loop_header
      %s21 = sphi 0, %s25
      %p22 = scmp.ge.s32.totalorder %s21, 4
      %s31 = sphi 0, %s33
      %s34 = sphi 0, %s31
      %s35 = sphi 0, %s34
      %s51 = sphi 0, %s35
      %s57 = sphi 0, %s59
      %s60 = sphi 0, %s57
      %s61 = sphi 0, %s60
      %s77 = sphi 0, %s61
      %s81 = sphi 0, %s81
      %s83 = sphi 0, %s81
      %s84 = sphi 0, %s83
      %s98 = sphi 0, %s84
      %s102 = sphi 0, %s102
      %s104 = sphi 0, %s102
      %s105 = sphi 0, %s104
      %s119 = sphi 0, %s105
      %s123 = sphi 0, %s123
      %s125 = sphi 0, %s123
      %s126 = sphi 0, %s125
      %s140 = sphi 0, %s126
      %s144 = sphi 0, %s144
      %s146 = sphi 0, %s144
      %s147 = sphi 0, %s146
      %s161 = sphi 0, %s147
      %s167 = sphi 0, %s169
      %s170 = sphi 0, %s167
      %s171 = sphi 0, %s170
      %s187 = sphi 0, %s171
    $region4: #{tpu_custom_call.1} parent=1 // loop_header_branch
      %24 = sbr.rel (%p22) target = $region8
    $region5: #{tpu_custom_call.1} parent=1 // loop_body
      %s26 = ssub.s32 %s21, 1
      %s27 = ssub.s32 %s21, 2
      %s28 = sadd.s32 %s21, 1
      %s29 = ssub.s32 %s21, %s28
      %p30 = scmp.eq.s32.totalorder %s29, 0
      %s32 = sadd.s32 %s31, 1
      %s33 = scalar_select %p30, %s31, %s32
      %p36 = pneg %p30
      %p37 = scmp.eq.s32.totalorder %s21, 1
      %p38 = por %p36, %p37
      %p39 = scmp.ne.s32.totalorder %s31, %s34
      %p40 = scmp.eq.s32.totalorder %s21, 0
      %p41 = por %p39, %p40
      %p42 = scmp.ne.s32.totalorder %s31, %s34
      %p43 = scmp.eq.s32.totalorder %s26, 1
      %p44 = por %p42, %p43
      %p45 = scmp.ne.s32.totalorder %s34, %s35
      %p46 = scmp.eq.s32.totalorder %s26, 0
      %p47 = por %p45, %p46
      %p48 = scmp.ne.s32.totalorder %s34, %s35
      %p49 = scmp.eq.s32.totalorder %s27, 1
      %p50 = por %p48, %p49
      %p52 = scmp.ne.s32.totalorder %s35, %s51
      %p53 = scmp.eq.s32.totalorder %s27, 0
      %p54 = por %p52, %p53
      %s55 = ssub.s32 %s21, %s28
      %p56 = scmp.eq.s32.totalorder %s55, 0
      %s58 = sadd.s32 %s57, 1
      %s59 = scalar_select %p56, %s57, %s58
      %p62 = pneg %p56
      %p63 = scmp.eq.s32.totalorder %s21, 1
      %p64 = por %p62, %p63
      %p65 = scmp.ne.s32.totalorder %s57, %s60
      %p66 = scmp.eq.s32.totalorder %s21, 0
      %p67 = por %p65, %p66
      %p68 = scmp.ne.s32.totalorder %s57, %s60
      %p69 = scmp.eq.s32.totalorder %s26, 1
      %p70 = por %p68, %p69
      %p71 = scmp.ne.s32.totalorder %s60, %s61
      %p72 = scmp.eq.s32.totalorder %s26, 0
      %p73 = por %p71, %p72
      %p74 = scmp.ne.s32.totalorder %s60, %s61
      %p75 = scmp.eq.s32.totalorder %s27, 1
      %p76 = por %p74, %p75
      %p78 = scmp.ne.s32.totalorder %s61, %s77
      %p79 = scmp.eq.s32.totalorder %s27, 0
      %p80 = por %p78, %p79
      %s82 = sadd.s32 %s81, 1
      %p85 = scmp.eq.s32.totalorder %s21, 1
      %p86 = scmp.ne.s32.totalorder %s81, %s83
      %p87 = scmp.eq.s32.totalorder %s21, 0
      %p88 = por %p86, %p87
      %p89 = scmp.ne.s32.totalorder %s81, %s83
      %p90 = scmp.eq.s32.totalorder %s26, 1
      %p91 = por %p89, %p90
      %p92 = scmp.ne.s32.totalorder %s83, %s84
      %p93 = scmp.eq.s32.totalorder %s26, 0
      %p94 = por %p92, %p93
      %p95 = scmp.ne.s32.totalorder %s83, %s84
      %p96 = scmp.eq.s32.totalorder %s27, 1
      %p97 = por %p95, %p96
      %p99 = scmp.ne.s32.totalorder %s84, %s98
      %p100 = scmp.eq.s32.totalorder %s27, 0
      %p101 = por %p99, %p100
      %s103 = sadd.s32 %s102, 1
      %p106 = scmp.eq.s32.totalorder %s21, 1
      %p107 = scmp.ne.s32.totalorder %s102, %s104
      %p108 = scmp.eq.s32.totalorder %s21, 0
      %p109 = por %p107, %p108
      %p110 = scmp.ne.s32.totalorder %s102, %s104
      %p111 = scmp.eq.s32.totalorder %s26, 1
      %p112 = por %p110, %p111
      %p113 = scmp.ne.s32.totalorder %s104, %s105
      %p114 = scmp.eq.s32.totalorder %s26, 0
      %p115 = por %p113, %p114
      %p116 = scmp.ne.s32.totalorder %s104, %s105
      %p117 = scmp.eq.s32.totalorder %s27, 1
      %p118 = por %p116, %p117
      %p120 = scmp.ne.s32.totalorder %s105, %s119
      %p121 = scmp.eq.s32.totalorder %s27, 0
      %p122 = por %p120, %p121
      %s124 = sadd.s32 %s123, 1
      %p127 = scmp.eq.s32.totalorder %s21, 1
      %p128 = scmp.ne.s32.totalorder %s123, %s125
      %p129 = scmp.eq.s32.totalorder %s21, 0
      %p130 = por %p128, %p129
      %p131 = scmp.ne.s32.totalorder %s123, %s125
      %p132 = scmp.eq.s32.totalorder %s26, 1
      %p133 = por %p131, %p132
      %p134 = scmp.ne.s32.totalorder %s125, %s126
      %p135 = scmp.eq.s32.totalorder %s26, 0
      %p136 = por %p134, %p135
      %p137 = scmp.ne.s32.totalorder %s125, %s126
      %p138 = scmp.eq.s32.totalorder %s27, 1
      %p139 = por %p137, %p138
      %p141 = scmp.ne.s32.totalorder %s126, %s140
      %p142 = scmp.eq.s32.totalorder %s27, 0
      %p143 = por %p141, %p142
      %s145 = sadd.s32 %s144, 1
      %p148 = scmp.eq.s32.totalorder %s21, 1
      %p149 = scmp.ne.s32.totalorder %s144, %s146
      %p150 = scmp.eq.s32.totalorder %s21, 0
      %p151 = por %p149, %p150
      %p152 = scmp.ne.s32.totalorder %s144, %s146
      %p153 = scmp.eq.s32.totalorder %s26, 1
      %p154 = por %p152, %p153
      %p155 = scmp.ne.s32.totalorder %s146, %s147
      %p156 = scmp.eq.s32.totalorder %s26, 0
      %p157 = por %p155, %p156
      %p158 = scmp.ne.s32.totalorder %s146, %s147
      %p159 = scmp.eq.s32.totalorder %s27, 1
      %p160 = por %p158, %p159
      %p162 = scmp.ne.s32.totalorder %s147, %s161
      %p163 = scmp.eq.s32.totalorder %s27, 0
      %p164 = por %p162, %p163
      %s165 = ssub.s32 %s21, %s28
      %p166 = scmp.eq.s32.totalorder %s165, 0
      %s168 = sadd.s32 %s167, 1
      %s169 = scalar_select %p166, %s167, %s168
      %p172 = pneg %p166
      %p173 = scmp.eq.s32.totalorder %s21, 1
      %p174 = por %p172, %p173
      %p175 = scmp.ne.s32.totalorder %s167, %s170
      %p176 = scmp.eq.s32.totalorder %s21, 0
      %p177 = por %p175, %p176
      %p178 = scmp.ne.s32.totalorder %s167, %s170
      %p179 = scmp.eq.s32.totalorder %s26, 1
      %p180 = por %p178, %p179
      %p181 = scmp.ne.s32.totalorder %s170, %s171
      %p182 = scmp.eq.s32.totalorder %s26, 0
      %p183 = por %p181, %p182
      %p184 = scmp.ne.s32.totalorder %s170, %s171
      %p185 = scmp.eq.s32.totalorder %s27, 1
      %p186 = por %p184, %p185
      %p188 = scmp.ne.s32.totalorder %s171, %s187
      %p189 = scmp.eq.s32.totalorder %s27, 0
      %p190 = por %p188, %p189
      %p191 = scmp.le.s32.totalorder 1, %s21
      %p192 = scmp.lt.s32.totalorder %s21, 3
      %p193 = pnand %p191, %p192
      %p194 = pneg %p193
      // Predicated region
      $region9: #{tpu_custom_call.1} parent=5 // pred_check
        _
      $region10: #{tpu_custom_call.1} parent=5 // pred_check_branch
        %196 = sbr.rel (%p193) target = $region12
      $region11: #{tpu_custom_call.1} parent=5 // pred_region
        %s197 = ssub.s32 %s21, 1
        // Predicated region
        $region13: #{tpu_custom_call.1} parent=11 // pred_check
          %p198 = pneg %p94
        $region14: #{tpu_custom_call.1} parent=11 // pred_check_branch
          %200 = sbr.rel (%p198) target = $region16
        $region15: #{tpu_custom_call.1} parent=11 // pred_region
          %202 = vsyncadd [#allocation6], 0
          %s203 = sshll.u32 %s2, 4
          %s204 = int_to_ptr.hbm [resolvable:$true] %s203
          %s205 = sshll.u32 [#allocation7], 4
          %s206 = int_to_ptr.vmem [resolvable:$true] %s205
          %211 = dma.hbm_to_vmem [thread:$0]  %s204, 1024, %s206, [#allocation6], 64, 64, 4
        $region16: #{tpu_custom_call.1} parent=11 // pred_fallthru
          _
        // Predicated region
        $region17: #{tpu_custom_call.1} parent=11 // pred_check
          %p212 = pneg %p115
        $region18: #{tpu_custom_call.1} parent=11 // pred_check_branch
          %214 = sbr.rel (%p212) target = $region20
        $region19: #{tpu_custom_call.1} parent=11 // pred_region
          _
        $region20: #{tpu_custom_call.1} parent=11 // pred_fallthru
          _
        // Predicated region
        $region21: #{tpu_custom_call.1} parent=11 // pred_check
          %p215 = pneg %p136
        $region22: #{tpu_custom_call.1} parent=11 // pred_check_branch
          %217 = sbr.rel (%p215) target = $region24
        $region23: #{tpu_custom_call.1} parent=11 // pred_region
          _
        $region24: #{tpu_custom_call.1} parent=11 // pred_fallthru
          _
        // Predicated region
        $region25: #{tpu_custom_call.1} parent=11 // pred_check
          %p218 = pneg %p157
        $region26: #{tpu_custom_call.1} parent=11 // pred_check_branch
          %220 = sbr.rel (%p218) target = $region28
        $region27: #{tpu_custom_call.1} parent=11 // pred_region
          _
        $region28: #{tpu_custom_call.1} parent=11 // pred_fallthru
          _
      $region12: #{tpu_custom_call.1} parent=5 // pred_fallthru
        _
      %p221 = scmp.lt.s32.totalorder %s21, 2
      // Predicated region
      $region29: #{tpu_custom_call.1} parent=5 // pred_check
        %p222 = pneg %p221
      $region30: #{tpu_custom_call.1} parent=5 // pred_check_branch
        %224 = sbr.rel (%p222) target = $region32
      $region31: #{tpu_custom_call.1} parent=5 // pred_region
        // Predicated region
        $region33: #{tpu_custom_call.1} parent=31 // pred_check
          %p225 = pneg %p41
        $region34: #{tpu_custom_call.1} parent=31 // pred_check_branch
          %227 = sbr.rel (%p225) target = $region36
        $region35: #{tpu_custom_call.1} parent=31 // pred_region
          %s228 = sand.u32 %s31, 1
          %s229 = scalar_lea.sflag [#allocation3], %s228
          %s230 = sand.u32 %s31, 1
          %s231 = smul.addr %s230, 16
          %s232 = scalar_lea.vmem [#allocation2], %s231
          %s233 = smul.u32 2, %s21
          %235 = vsyncadd %s229, 0
          %s236 = smul.addr %s233, 8
          %s237 = scalar_lea.hbm %s0, %s236
          %s238 = sshll.u32 %s237, 4
          %s239 = int_to_ptr.hbm [resolvable:$true] %s238
          %s240 = sshll.u32 %s232, 4
          %s241 = int_to_ptr.vmem [resolvable:$true] %s240
          %246 = dma.hbm_to_vmem [thread:$0]  %s239, 256, %s241, %s229, 128, 128, 8
        $region36: #{tpu_custom_call.1} parent=31 // pred_fallthru
          _
        // Predicated region
        $region37: #{tpu_custom_call.1} parent=31 // pred_check
          %p247 = pneg %p67
        $region38: #{tpu_custom_call.1} parent=31 // pred_check_branch
          %249 = sbr.rel (%p247) target = $region40
        $region39: #{tpu_custom_call.1} parent=31 // pred_region
          %s250 = sand.u32 %s21, 1
          %s251 = scalar_lea.sflag [#allocation6], %s250
          %s252 = sand.u32 %s57, 1
          %s253 = smul.addr %s252, 16
          %s254 = scalar_lea.vmem [#allocation5], %s253
          %s255 = smul.u32 2, %s21
          %257 = vsyncadd %s251, 0
          %s258 = sadd.s32 %s255, 4
          %s259 = smul.addr %s258, 8
          %s260 = scalar_lea.hbm %s1, %s259
          %s261 = sshll.u32 %s260, 4
          %s262 = int_to_ptr.hbm [resolvable:$true] %s261
          %s263 = sshll.u32 %s254, 4
          %s264 = int_to_ptr.vmem [resolvable:$true] %s263
          %269 = dma.hbm_to_vmem [thread:$0]  %s262, 256, %s264, %s251, 128, 128, 8
        $region40: #{tpu_custom_call.1} parent=31 // pred_fallthru
          _
      $region32: #{tpu_custom_call.1} parent=5 // pred_fallthru
        _
      %p270 = scmp.le.s32.totalorder 1, %s21
      %p271 = scmp.lt.s32.totalorder %s21, 3
      %p272 = pnand %p270, %p271
      %p273 = pneg %p272
      // Predicated region
      $region41: #{tpu_custom_call.1} parent=5 // pred_check
        _
      $region42: #{tpu_custom_call.1} parent=5 // pred_check_branch
        %275 = sbr.rel (%p272) target = $region44
      $region43: #{tpu_custom_call.1} parent=5 // pred_region
        %s276 = ssub.s32 %s21, 1
        %s277 = sand.u32 %s34, 1
        %s278 = scalar_lea.sflag [#allocation3], %s277
        %s279 = sand.u32 %s34, 1
        %s280 = smul.addr %s279, 16
        %s281 = scalar_lea.vmem [#allocation2], %s280
        // Predicated region
        $region45: #{tpu_custom_call.1} parent=43 // pred_check
          %p282 = pneg %p47
        $region46: #{tpu_custom_call.1} parent=43 // pred_check_branch
          %284 = sbr.rel (%p282) target = $region48
        $region47: #{tpu_custom_call.1} parent=43 // pred_region
          %286 = dma.done %s278, 256
        $region48: #{tpu_custom_call.1} parent=43 // pred_fallthru
          _
        %s287 = sand.u32 %s26, 1
        %s288 = scalar_lea.sflag [#allocation6], %s287
        %s289 = sand.u32 %s60, 1
        %s290 = smul.addr %s289, 16
        %s291 = scalar_lea.vmem [#allocation5], %s290
        // Predicated region
        $region49: #{tpu_custom_call.1} parent=43 // pred_check
          %p292 = pneg %p73
        $region50: #{tpu_custom_call.1} parent=43 // pred_check_branch
          %294 = sbr.rel (%p292) target = $region52
        $region51: #{tpu_custom_call.1} parent=43 // pred_region
          %296 = dma.done %s288, 256
        $region52: #{tpu_custom_call.1} parent=43 // pred_fallthru
          _
        // Predicated region
        $region53: #{tpu_custom_call.1} parent=43 // pred_check
          %p297 = pneg %p94
        $region54: #{tpu_custom_call.1} parent=43 // pred_check_branch
          %299 = sbr.rel (%p297) target = $region56
        $region55: #{tpu_custom_call.1} parent=43 // pred_region
          %301 = dma.done [#allocation6], 1024
        $region56: #{tpu_custom_call.1} parent=43 // pred_fallthru
          _
        %s302 = sand.u32 %s34, 1
        %s303 = scalar_lea.sflag [#allocation3], %s302
        %s304 = sand.u32 %s34, 1
        %s305 = smul.addr %s304, 16
        %s306 = scalar_lea.vmem [#allocation2], %s305
        %p307 = pneg %p47
        %p308 = pneg %p44
        %s309 = sand.u32 %s26, 1
        %s310 = scalar_lea.sflag [#allocation6], %s309
        %s311 = sand.u32 %s60, 1
        %s312 = smul.addr %s311, 16
        %s313 = scalar_lea.vmem [#allocation5], %s312
        %p314 = pneg %p73
        %p315 = pneg %p70
        %p316 = pneg %p94
        %p317 = pneg %p91
        %p318 = pneg %p115
        %p319 = pneg %p112
        %p320 = pneg %p136
        %p321 = pneg %p133
        %p322 = pneg %p157
        %p323 = pneg %p154
        %p324 = pneg %p183
        %p325 = pneg %p180
        %s326 = sand.u32 %s170, 1
        %s327 = scalar_lea.sflag [#allocation4], %s326
        %s328 = sand.u32 %s170, 1
        %s329 = smul.addr %s328, 16
        %s330 = scalar_lea.vmem [#allocation8], %s329
        %s331 = smul.u32 2, %s26
        %s332 = smul.u32 2, %s26
        %s333 = smul.u32 2, %s26
        %v334 = vld [vmem:[%s291] sm:$0xff]
        %v335 = vld [vmem:[%s291 + $0x8] sm:$0xff]
        %v336 = vpack.c.bf16 %v335, %v334
        %v337 = vld [vmem:[#allocation7] sm:$0xf]
        %v338 = vld [vmem:[#allocation7 + $0x4] sm:$0xf]
        %v339 = vld [vmem:[#allocation7 + $0x8] sm:$0xf]
        %v340 = vld [vmem:[#allocation7 + $0xc] sm:$0xf]
        %v341 = vld [vmem:[#allocation7 + $0x10] sm:$0xf]
        %v342 = vld [vmem:[#allocation7 + $0x14] sm:$0xf]
        %v343 = vld [vmem:[#allocation7 + $0x18] sm:$0xf]
        %v344 = vld [vmem:[#allocation7 + $0x1c] sm:$0xf]
        %v345 = vld [vmem:[#allocation7 + $0x20] sm:$0xf]
        %v346 = vld [vmem:[#allocation7 + $0x24] sm:$0xf]
        %v347 = vld [vmem:[#allocation7 + $0x28] sm:$0xf]
        %v348 = vld [vmem:[#allocation7 + $0x2c] sm:$0xf]
        %v349 = vld [vmem:[#allocation7 + $0x30] sm:$0xf]
        %v350 = vld [vmem:[#allocation7 + $0x34] sm:$0xf]
        %v351 = vld [vmem:[#allocation7 + $0x38] sm:$0xf]
        %v352 = vld [vmem:[#allocation7 + $0x3c] sm:$0xf]
        %v353 = vld [vmem:[%s3] sm:$0x1]
        %v355 = vperm.slane %v353, 0
        %v373 = vunpack.c.l.b16 %v337
        %v374 = vunpack.c.l.b16 %v338
        %v375 = vunpack.c.l.b16 %v339
        %v376 = vunpack.c.l.b16 %v340
        %v377 = vunpack.c.l.b16 %v341
        %v378 = vunpack.c.l.b16 %v342
        %v379 = vunpack.c.l.b16 %v343
        %v380 = vunpack.c.l.b16 %v344
        %v381 = vunpack.c.l.b16 %v345
        %v382 = vunpack.c.l.b16 %v346
        %v383 = vunpack.c.l.b16 %v347
        %v384 = vunpack.c.l.b16 %v348
        %v385 = vunpack.c.l.b16 %v349
        %v386 = vunpack.c.l.b16 %v350
        %v387 = vunpack.c.l.b16 %v351
        %v388 = vunpack.c.l.b16 %v352
        %v389 = vpack.c.b16 %v374, %v373
        %v390 = vpack.c.b16 %v376, %v375
        %v391 = vpack.c.b16 %v378, %v377
        %v392 = vpack.c.b16 %v380, %v379
        %v393 = vpack.c.b16 %v382, %v381
        %v394 = vpack.c.b16 %v384, %v383
        %v395 = vpack.c.b16 %v386, %v385
        %v396 = vpack.c.b16 %v388, %v387
        %405 = vmatpush.bf16.msra.mxu0 %v396
        %406 = vmatpush.bf16.msra.mxu0 %v395
        %407 = vmatpush.bf16.msra.mxu0 %v394
        %408 = vmatpush.bf16.msra.mxu0 %v393
        %409 = vmatpush.bf16.msra.mxu0 %v392
        %410 = vmatpush.bf16.msra.mxu0 %v391
        %411 = vmatpush.bf16.msra.mxu0 %v390
        %412 = vmatpush.bf16.msra.mxu0 %v389
        %413 = vmatmul.bf16.gmra.mxu0 %v336
        %v414 = vpop.f32.mrf.mxu0
        %v415 = vadd.f32 %v355, %v414
        %v416 = vpop.f32.mrf.mxu0
        %v417 = vadd.f32 %v355, %v416
        %418 = vdwg.mxu0
        %v419 = vld [vmem:[%s281] sm:$0xff]
        %v420 = vld [vmem:[%s281 + $0x8] sm:$0xff]
        %v421 = vadd.f32 %v419, %v415
        %v422 = vadd.f32 %v420, %v417
        %423 = vadd.xlane.f32.xlu0 %v421
        %v424 = vpop.xlane.xlu0 %423
        %425 = vadd.xlane.f32.xlu0 %v422
        %v426 = vpop.xlane.xlu0 %425
        %v427 = vrcp.pop 128.0
        %v428 = vmul.f32 128.0, %v427
        %v429 = vsub.f32 1.0, %v428
        %v430 = vmul.f32 %v427, %v429
        %v431 = vadd.f32 %v427, %v430
        %vm432 = vweird.f32 %v427
        %v433 = vsel %vm432, %v427, %v431
        %v434 = vmul.f32 %v424, %v433
        %v435 = vmul.f32 %v426, %v433
        %v436 = vsub.f32 %v421, %v434
        %v437 = vsub.f32 %v422, %v435
        %v438 = vmul.f32 %v436, %v436
        %v439 = vmul.f32 %v437, %v437
        %440 = vadd.xlane.f32.xlu0 %v438
        %v441 = vpop.xlane.xlu0 %440
        %442 = vadd.xlane.f32.xlu0 %v439
        %v443 = vpop.xlane.xlu0 %442
        %v444 = vmul.f32 %v441, %v433
        %v445 = vmul.f32 %v443, %v433
        %v446 = vadd.f32 %v444, 1e-05
        %v447 = vadd.f32 %v445, 1e-05
        %v448 = vrsqrt.pop %v446
        %v449 = vmul.f32 %v448, %v446
        %v450 = vmul.f32 %v449, %v448
        %v451 = vmul.f32 0.5, %v450
        %v452 = vsub.f32 1.5, %v451
        %v453 = vmul.f32 %v448, %v452
        %vm454 = vweird.f32 %v446
        %vm455 = vweird.f32 %v448
        %vm456 = vmor %vm454, %vm455
        %v457 = vsel %vm456, %v448, %v453
        %v458 = vrsqrt.pop %v447
        %v459 = vmul.f32 %v458, %v447
        %v460 = vmul.f32 %v459, %v458
        %v461 = vmul.f32 0.5, %v460
        %v462 = vsub.f32 1.5, %v461
        %v463 = vmul.f32 %v458, %v462
        %vm464 = vweird.f32 %v447
        %vm465 = vweird.f32 %v458
        %vm466 = vmor %vm464, %vm465
        %v467 = vsel %vm466, %v458, %v463
        %v468 = vmul.f32 %v436, %v457
        %v469 = vmul.f32 %v437, %v467
        %v470 = vld [vmem:[%s4] sm:$0x1]
        %v472 = vperm.slane %v470, 0
        %v474 = vmul.f32 %v468, %v472
        %v475 = vmul.f32 %v469, %v472
        %v476 = vld [vmem:[%s5] sm:$0x1]
        %v478 = vperm.slane %v476, 0
        %v480 = vadd.f32 %v474, %v478
        %v481 = vadd.f32 %v475, %v478
        %482 = vst [vmem:[%s330] sm:$0xff] %v480
        %483 = vst [vmem:[%s330 + $0x8] sm:$0xff] %v481
        %s484 = sand.u32 %s170, 1
        %s485 = scalar_lea.sflag [#allocation4], %s484
        %s486 = sand.u32 %s170, 1
        %s487 = smul.addr %s486, 16
        %s488 = scalar_lea.vmem [#allocation8], %s487
        // Predicated region
        $region57: #{tpu_custom_call.1} parent=43 // pred_check
          %p489 = pneg %p180
        $region58: #{tpu_custom_call.1} parent=43 // pred_check_branch
          %491 = sbr.rel (%p489) target = $region60
        $region59: #{tpu_custom_call.1} parent=43 // pred_region
          %s492 = smul.u32 2, %s26
          %494 = vsyncadd %s485, 0
          %s495 = smul.addr %s492, 8
          %s496 = scalar_lea.hbm %s6, %s495
          %s497 = sshll.u32 %s488, 4
          %s498 = int_to_ptr.vmem [resolvable:$true] %s497
          %s499 = sshll.u32 %s496, 4
          %s500 = int_to_ptr.hbm [resolvable:$true] %s499
          %505 = dma.vmem_to_hbm [thread:$0]  %s498, 256, %s500, %s485, 128, 128, 8
        $region60: #{tpu_custom_call.1} parent=43 // pred_fallthru
          _
      $region44: #{tpu_custom_call.1} parent=5 // pred_fallthru
        _
      %p506 = scmp.le.s32.totalorder 2, %s21
      // Predicated region
      $region61: #{tpu_custom_call.1} parent=5 // pred_check
        %p507 = pneg %p506
      $region62: #{tpu_custom_call.1} parent=5 // pred_check_branch
        %509 = sbr.rel (%p507) target = $region64
      $region63: #{tpu_custom_call.1} parent=5 // pred_region
        %s510 = ssub.s32 %s21, 2
        // Predicated region
        $region65: #{tpu_custom_call.1} parent=63 // pred_check
          %p511 = pneg %p186
        $region66: #{tpu_custom_call.1} parent=63 // pred_check_branch
          %513 = sbr.rel (%p511) target = $region68
        $region67: #{tpu_custom_call.1} parent=63 // pred_region
          %s514 = sand.u32 %s171, 1
          %s515 = scalar_lea.sflag [#allocation4], %s514
          %s516 = sand.u32 %s171, 1
          %s517 = smul.addr %s516, 16
          %s518 = scalar_lea.vmem [#allocation8], %s517
          %520 = dma.done %s515, 256
        $region68: #{tpu_custom_call.1} parent=63 // pred_fallthru
          _
      $region64: #{tpu_custom_call.1} parent=5 // pred_fallthru
        _
    $region6: #{tpu_custom_call.1} parent=1 // loop_footer
      %s25 = sadd.s32 1, %s21
    $region7: #{tpu_custom_call.1} parent=1 // loop_footer_branch
      %20 = sbr.rel target = $region3
    $region8: #{tpu_custom_call.1} parent=1 // loop_exit
      _
    %521 = vsyncpa [#allocation3], 1
    %s522 = scalar_lea.sflag [#allocation3], 1
    %523 = vsyncpa %s522, 1
    %524 = vsyncpa [#allocation6], 1
    %s525 = scalar_lea.sflag [#allocation6], 1
    %526 = vsyncpa %s525, 1
    %527 = vsyncpa [#allocation4], 1
    %s528 = scalar_lea.sflag [#allocation4], 1
    %529 = vsyncpa %s528, 1

</llo_original>
